<compile_context>
chip_gen: v5e
topology: v5e:2x2
jax: 0.10.0
libtpu: 0.0.40
codegen_flags: <defaults>
</compile_context>

<pallas_src>
import jax
import jax.numpy as jnp
import numpy as np
from jax.experimental import pallas as pl
from jax.experimental.pallas import tpu as pltpu


# ----------------------------- kernel ---------------------------------------

def encoder_kernel(x_ref, wct_ref, bc_ref, wl_ref, bl_ref, gamma_ref, beta_ref,
                   o_ref, feats_ref):
    """Fused backbone-stem + global-avg-pool + Linear + BatchNorm1d.

    Grid = (B, HW // HW_T); batch-major, HW tiles innermost ("arbitrary").

    x_ref     : (C, HW_T)  bf16  one image's channel-major spatial tile (HW on lanes)
    wct_ref   : (F, C)     f32   1x1-conv weight (torch Conv2d weight (F,C,1,1) squeezed)
    bc_ref    : (F, 1)     f32   conv bias
    wl_ref    : (F, E)     f32   Linear weight (transposed from torch's (E, F))
    bl_ref    : (1, E)     f32   Linear bias
    gamma_ref : (1, E)     f32   BatchNorm1d weight
    beta_ref  : (1, E)     f32   BatchNorm1d bias
    o_ref     : (B, E)     f32   output block (resident across the whole grid)
    feats_ref : (F, B)     f32   VMEM scratch: pooled-sum accumulator (persists)
    """
    b = pl.program_id(0)
    k = pl.program_id(1)
    num_k = pl.num_programs(1)

    C, hw_t = x_ref.shape
    F = wct_ref.shape[0]
    B = o_ref.shape[0]

    # Zero the pooled-sum accumulator once, at the very first grid step.
    @pl.when(jnp.logical_and(b == 0, k == 0))
    def _init():
        feats_ref[...] = jnp.zeros_like(feats_ref)

    # ---- backbone stand-in: 1x1 conv + ReLU on a lane-dense (F, HW_T) tile ----
    # C is tiny (3), so the channel contraction is C broadcast VPU FMAs instead
    # of a K=3 MXU matmul (which would use ~2% of the systolic array).
    x = x_ref[...]                                    # (C, HW_T) bf16
    wct = wct_ref[...]                                # (F, C)    f32
    h = jnp.broadcast_to(bc_ref[...], (F, hw_t))      # conv bias
    for c in range(C):                                # static, C == 3
        h = h + wct[:, c:c + 1] * x[c:c + 1, :]       # bf16*f32 -> f32 on the VPU
    h = jnp.maximum(h, 0.0)                           # ReLU

    # ---- global average pool: per-tile partial sum on the (idle) MXU ----------
    # (F, HW_T) @ (HW_T, 1) ones-column keeps the XLU free; accumulate across HW
    # tiles with one VPU add into the f32 scratch.  A one-hot lane mask selects
    # the column of image b (B sits on the lanes of the tiny (F, B) scratch).
    ones_col = jnp.ones((hw_t, 1), jnp.float32)
    col = jnp.dot(h, ones_col, preferred_element_type=jnp.float32)   # (F, 1)
    lane = jax.lax.broadcasted_iota(jnp.int32, (F, B), 1)
    feats_ref[...] += jnp.where(lane == b, col, 0.0)

    # ---- fused head on the final grid step: Linear + BatchNorm1d --------------
    @pl.when(jnp.logical_and(b == B - 1, k == num_k - 1))
    def _head():
        inv_hw = 1.0 / (hw_t * num_k)
        feats = (feats_ref[...] * inv_hw).T           # (B, F) mean-pooled features
        # Head matmul kept in f32: at small batch sizes BatchNorm's 1/std would
        # amplify bf16 rounding of the nearly batch-constant pooled features,
        # and the head is only a few hundred KFLOPs (pure latency anyway).
        y = jnp.dot(feats, wl_ref[...], preferred_element_type=jnp.float32)
        y = y + bl_ref[...]
        # BatchNorm1d with training-mode batch statistics (biased variance).
        # TODO(synk): eval-mode prediction would use running_mean/running_var;
        # plumb them in as two extra (1, E) inputs to match torch .eval() exactly.
        mean = jnp.mean(y, axis=0, keepdims=True)
        var = jnp.mean((y - mean) ** 2, axis=0, keepdims=True)
        o_ref[...] = (gamma_ref[...] * (y - mean) * jax.lax.rsqrt(var + 1e-5)
                      + beta_ref[...])


# ----------------------------- wrapper ---------------------------------------

def _pick_hw_tile(hw_total, cap):
    """Largest multiple-of-128 divisor of hw_total that is <= cap (else full)."""
    if hw_total % 128 != 0:
        return hw_total                       # fall back to one full block
    t = max(min(cap - cap % 128, hw_total), 128)
    while hw_total % t:
        t -= 128
    return t


def encoder_cnn_forward(images, params, *, hw_tile_cap=2048):
    """images: (B, C, H, W) float32 NCHW.  Returns (B, embed_size) float32."""
    B, C, H, W = images.shape
    HW = H * W
    F, E = params["wl"].shape

    # Free reshape (no transpose): NCHW -> (B, C, HW), HW on the lane dim.
    # bf16 halves the dominant activation DMA; all in-kernel accumulation is f32.
    x = images.reshape(B, C, HW).astype(jnp.bfloat16)

    hw_t = _pick_hw_tile(HW, hw_tile_cap)
    num_k = HW // hw_t

    return pl.pallas_call(
        encoder_kernel,
        out_shape=jax.ShapeDtypeStruct((B, E), jnp.float32),
        grid=(B, num_k),
        in_specs=[
            # one image's (C, hw_t) tile; leading batch dim squeezed away
            pl.BlockSpec((pl.Squeezed(), C, hw_t), lambda b, k: (b, 0, k)),
            pl.BlockSpec((F, C), lambda b, k: (0, 0)),
            pl.BlockSpec((F, 1), lambda b, k: (0, 0)),
            pl.BlockSpec((F, E), lambda b, k: (0, 0)),
            pl.BlockSpec((1, E), lambda b, k: (0, 0)),
            pl.BlockSpec((1, E), lambda b, k: (0, 0)),
            pl.BlockSpec((1, E), lambda b, k: (0, 0)),
        ],
        # Output block is resident in VMEM across the whole grid and written
        # once by the fused head at the final step (E multiple of 128).
        out_specs=pl.BlockSpec((B, E), lambda b, k: (0, 0)),
        scratch_shapes=[pltpu.VMEM((F, B), jnp.float32)],
        compiler_params=pltpu.CompilerParams(
            # Both axes "arbitrary": the fused batch-stat BatchNorm head and the
            # shared feats accumulator make the batch axis a carried reduction.
            # (At ResNet scale, split the stem into a batch-"parallel" call for
            # v7x's two TensorCores and keep the tiny head as a separate call.)
            dimension_semantics=("arbitrary", "arbitrary"),
            # 32 MiB is safe on every generation for these shapes; at ResNet
            # scale raise to 64-96 MiB on v5e/v6e (128 MiB physical) and
            # re-derive (~half) on v7x (64 MiB physical).
            vmem_limit_bytes=32 * 1024 * 1024,
        ),
    )(x, params["wct"], params["bc"], params["wl"],
      params["bl"], params["gamma"], params["beta"])


# ----------------------------- reference -------------------------------------

def encoder_cnn_reference(images, params):
    B, C, H, W = images.shape
    x = images.reshape(B, C, H * W).astype(jnp.float32)            # (B, C, HW)
    h = jnp.einsum("fc,bcs->bfs", params["wct"], x) + params["bc"][None]
    h = jnp.maximum(h, 0.0)
    feats = jnp.mean(h, axis=2)                                    # (B, F)
    y = feats @ params["wl"] + params["bl"]                        # (B, E)
    mean = jnp.mean(y, axis=0, keepdims=True)
    var = jnp.mean((y - mean) ** 2, axis=0, keepdims=True)
    return params["gamma"] * (y - mean) / jnp.sqrt(var + 1e-5) + params["beta"]


# ----------------------------- main ------------------------------------------

if __name__ == "__main__":
    # Small but TPU-friendly shapes: B=8 (>= 8 sublanes for the head / stable
    # batch-norm statistics), C=3 (RGB), 16x16 spatial (HW=256), F=128 as a
    # lane-aligned stand-in for ResNet-152's 2048, embed E=128 (multiple of 128).
    B, C, H, W = 8, 3, 16, 16
    F, E = 128, 128

    key = jax.random.PRNGKey(0)
    k_img, k_wc, k_bc, k_wl, k_bl = jax.random.split(key, 5)

    images = jax.random.normal(k_img, (B, C, H, W), dtype=jnp.float32)

    params = {
        # backbone stand-in: 1x1 conv.  torch Conv2d(C, F, 1).weight is
        # (F, C, 1, 1) -> squeezed to (F, C); bias (F,) -> (F, 1).
        "wct": jax.random.normal(k_wc, (F, C), dtype=jnp.float32) * 0.1,
        "bc": jax.random.normal(k_bc, (F, 1), dtype=jnp.float32) * 0.01,
        # nn.Linear(resnet.fc.in_features, embed_size): weight (E, F) -> (F, E)
        "wl": jax.random.normal(k_wl, (F, E), dtype=jnp.float32) * 0.1,
        "bl": jax.random.normal(k_bl, (1, E), dtype=jnp.float32) * 0.01,
        # nn.BatchNorm1d(embed_size): gamma=1, beta=0 at init
        "gamma": jnp.ones((1, E), dtype=jnp.float32),
        "beta": jnp.zeros((1, E), dtype=jnp.float32),
    }

    # hw_tile_cap=128 -> 2 HW tiles per image: exercises the tiled-accumulation
    # path even at this toy spatial size (at ResNet scale use 2k-8k per tile).
    out = encoder_cnn_forward(images, params, hw_tile_cap=128)
    out = jax.block_until_ready(out)

    ref = encoder_cnn_reference(images, params)
    # Image tensor is bf16 at the kernel boundary (bandwidth) vs f32 reference,
    # and BatchNorm divides by the per-dim batch std -> loosened tolerance.
    np.testing.assert_allclose(np.asarray(out), np.asarray(ref), rtol=3e-2, atol=3e-2)

    assert out.shape == (B, E) and out.dtype == jnp.float32
    print("KERNEL_OK")
</pallas_src>

<mosaic_0001>
module attributes {stable_mosaic.version = 11 : i64} {
  func.func @encoder_kernel(%arg0: i32, %arg1: i32, %arg2: memref<1x3x128xbf16, #tpu.memory_space<vmem>>, %arg3: memref<128x3xf32, #tpu.memory_space<vmem>>, %arg4: memref<128x1xf32, #tpu.memory_space<vmem>>, %arg5: memref<128x128xf32, #tpu.memory_space<vmem>>, %arg6: memref<1x128xf32, #tpu.memory_space<vmem>>, %arg7: memref<1x128xf32, #tpu.memory_space<vmem>>, %arg8: memref<1x128xf32, #tpu.memory_space<vmem>>, %arg9: memref<8x128xf32, #tpu.memory_space<vmem>>, %arg10: memref<128x8xf32, #tpu.memory_space<vmem>>) attributes {dimension_semantics = [#tpu.dimension_semantics<arbitrary>, #tpu.dimension_semantics<arbitrary>], iteration_bounds = array<i64: 8, 2>, scalar_prefetch = 0 : i64, scratch_operands = 1 : i64, tpu.core_type = #tpu.core_type<tc>, window_params = [{transform_indices = @transform_0, window_bounds = array<i64: 1, 3, 128>}, {pipeline_mode = #tpu.pipeline_mode<synchronous>, transform_indices = @transform_1, window_bounds = array<i64: 128, 3>}, {pipeline_mode = #tpu.pipeline_mode<synchronous>, transform_indices = @transform_2, window_bounds = array<i64: 128, 1>}, {pipeline_mode = #tpu.pipeline_mode<synchronous>, transform_indices = @transform_3, window_bounds = array<i64: 128, 128>}, {pipeline_mode = #tpu.pipeline_mode<synchronous>, transform_indices = @transform_4, window_bounds = array<i64: 1, 128>}, {pipeline_mode = #tpu.pipeline_mode<synchronous>, transform_indices = @transform_5, window_bounds = array<i64: 1, 128>}, {pipeline_mode = #tpu.pipeline_mode<synchronous>, transform_indices = @transform_6, window_bounds = array<i64: 1, 128>}, {pipeline_mode = #tpu.pipeline_mode<synchronous>, transform_indices = @transform_7, window_bounds = array<i64: 8, 128>}]} {
    %c0_i32 = arith.constant 0 : i32
    %0 = arith.cmpi eq, %arg0, %c0_i32 : i32
    %c0_i32_0 = arith.constant 0 : i32
    %1 = arith.cmpi eq, %arg1, %c0_i32_0 : i32
    %2 = arith.andi %0, %1 : i1
    %3 = arith.extui %2 : i1 to i32
    %c0_i32_1 = arith.constant 0 : i32
    %4 = arith.cmpi ne, %3, %c0_i32_1 : i32
    scf.if %4 {
      %cst_16 = arith.constant 0.000000e+00 : f32
      %51 = vector.broadcast %cst_16 : f32 to vector<128x8xf32>
      %c0_17 = arith.constant 0 : index
      %c0_18 = arith.constant 0 : index
      %52 = vector.load %arg10[%c0_17, %c0_18] : memref<128x8xf32, #tpu.memory_space<vmem>>, vector<128x8xf32>
      tpu.vector_store %arg10[%c0_17, %c0_18], %51 {strides = array<i32>} : memref<128x8xf32, #tpu.memory_space<vmem>>, vector<128x8xf32>,
    } else {
    }
    %c0 = arith.constant 0 : index
    %c0_2 = arith.constant 0 : index
    %c0_3 = arith.constant 0 : index
    %5 = vector.load %arg2[%c0, %c0_2, %c0_3] : memref<1x3x128xbf16, #tpu.memory_space<vmem>>, vector<1x3x128xbf16>
    %6 = vector.shape_cast %5 : vector<1x3x128xbf16> to vector<3x128xbf16>
    %c0_4 = arith.constant 0 : index
    %c0_5 = arith.constant 0 : index
    %7 = vector.load %arg3[%c0_4, %c0_5] : memref<128x3xf32, #tpu.memory_space<vmem>>, vector<128x3xf32>
    %c0_6 = arith.constant 0 : index
    %c0_7 = arith.constant 0 : index
    %8 = vector.load %arg4[%c0_6, %c0_7] : memref<128x1xf32, #tpu.memory_space<vmem>>, vector<128x1xf32>
    %9 = vector.shape_cast %8 : vector<128x1xf32> to vector<128x1xf32>
    %10 = vector.broadcast %9 : vector<128x1xf32> to vector<128x128xf32>
    %11 = vector.extract_strided_slice %7 {offsets = [0, 0], sizes = [128, 1], strides = [1, 1]} : vector<128x3xf32> to vector<128x1xf32>
    %12 = vector.extract_strided_slice %6 {offsets = [0, 0], sizes = [1, 128], strides = [1, 1]} : vector<3x128xbf16> to vector<1x128xbf16>
    %13 = arith.extf %12 : vector<1x128xbf16> to vector<1x128xf32>
    %14 = vector.broadcast %11 : vector<128x1xf32> to vector<128x128xf32>
    %15 = vector.broadcast %13 : vector<1x128xf32> to vector<128x128xf32>
    %16 = arith.mulf %14, %15 : vector<128x128xf32>
    %17 = arith.addf %10, %16 : vector<128x128xf32>
    %18 = vector.extract_strided_slice %7 {offsets = [0, 1], sizes = [128, 1], strides = [1, 1]} : vector<128x3xf32> to vector<128x1xf32>
    %19 = vector.extract_strided_slice %6 {offsets = [1, 0], sizes = [1, 128], strides = [1, 1]} : vector<3x128xbf16> to vector<1x128xbf16>
    %20 = arith.extf %19 : vector<1x128xbf16> to vector<1x128xf32>
    %21 = vector.broadcast %18 : vector<128x1xf32> to vector<128x128xf32>
    %22 = vector.broadcast %20 : vector<1x128xf32> to vector<128x128xf32>
    %23 = arith.mulf %21, %22 : vector<128x128xf32>
    %24 = arith.addf %17, %23 : vector<128x128xf32>
    %25 = vector.extract_strided_slice %7 {offsets = [0, 2], sizes = [128, 1], strides = [1, 1]} : vector<128x3xf32> to vector<128x1xf32>
    %26 = vector.extract_strided_slice %6 {offsets = [2, 0], sizes = [1, 128], strides = [1, 1]} : vector<3x128xbf16> to vector<1x128xbf16>
    %27 = arith.extf %26 : vector<1x128xbf16> to vector<1x128xf32>
    %28 = vector.broadcast %25 : vector<128x1xf32> to vector<128x128xf32>
    %29 = vector.broadcast %27 : vector<1x128xf32> to vector<128x128xf32>
    %30 = arith.mulf %28, %29 : vector<128x128xf32>
    %31 = arith.addf %24, %30 : vector<128x128xf32>
    %cst = arith.constant 0.000000e+00 : f32
    %32 = vector.broadcast %cst : f32 to vector<128x128xf32>
    %33 = arith.maximumf %31, %32 : vector<128x128xf32>
    %cst_8 = arith.constant 1.000000e+00 : f32
    %34 = vector.broadcast %cst_8 : f32 to vector<128x1xf32>
    %cst_9 = arith.constant dense<0.000000e+00> : vector<128x1xf32>
    %35 = tpu.matmul %33, %34, %cst_9 {dimension_numbers = #tpu.dot_dimension_numbers<[1], [0], [0], [1], [0, 0, 1, 1], [], []>} : vector<128x128xf32>, vector<128x1xf32>, vector<128x1xf32> -> vector<128x1xf32>
    %36 = tpu.iota {dimensions = array<i32: 1>} : vector<128x8xi32>
    %c0_10 = arith.constant 0 : index
    %c0_11 = arith.constant 0 : index
    %37 = vector.load %arg10[%c0_10, %c0_11] : memref<128x8xf32, #tpu.memory_space<vmem>>, vector<128x8xf32>
    %38 = vector.broadcast %arg0 : i32 to vector<128x8xi32>
    %39 = arith.cmpi eq, %36, %38 : vector<128x8xi32>
    %cst_12 = arith.constant 0.000000e+00 : f32
    %40 = vector.shape_cast %35 : vector<128x1xf32> to vector<128x1xf32>
    %41 = vector.broadcast %40 : vector<128x1xf32> to vector<128x8xf32>
    %42 = vector.broadcast %cst_12 : f32 to vector<128x8xf32>
    %43 = arith.select %39, %41, %42 : vector<128x8xi1>, vector<128x8xf32>
    %44 = arith.addf %37, %43 : vector<128x8xf32>
    %c0_13 = arith.constant 0 : index
    %c0_14 = arith.constant 0 : index
    %45 = vector.load %arg10[%c0_13, %c0_14] : memref<128x8xf32, #tpu.memory_space<vmem>>, vector<128x8xf32>
    tpu.vector_store %arg10[%c0_13, %c0_14], %44 {strides = array<i32>} : memref<128x8xf32, #tpu.memory_space<vmem>>, vector<128x8xf32>,
    %c7_i32 = arith.constant 7 : i32
    %46 = arith.cmpi eq, %arg0, %c7_i32 : i32
    %c1_i32 = arith.constant 1 : i32
    %47 = arith.cmpi eq, %arg1, %c1_i32 : i32
    %48 = arith.andi %46, %47 : i1
    %49 = arith.extui %48 : i1 to i32
    %c0_i32_15 = arith.constant 0 : i32
    %50 = arith.cmpi ne, %49, %c0_i32_15 : i32
    scf.if %50 {
      %c0_16 = arith.constant 0 : index
      %c0_17 = arith.constant 0 : index
      %51 = vector.load %arg10[%c0_16, %c0_17] : memref<128x8xf32, #tpu.memory_space<vmem>>, vector<128x8xf32>
      %cst_18 = arith.constant 3.906250e-03 : f32
      %52 = vector.broadcast %cst_18 : f32 to vector<128x8xf32>
      %53 = arith.mulf %51, %52 : vector<128x8xf32>
      %54 = tpu.transpose %53, [1, 0] : vector<128x8xf32> -> vector<8x128xf32>
      %c0_19 = arith.constant 0 : index
      %c0_20 = arith.constant 0 : index
      %55 = vector.load %arg5[%c0_19, %c0_20] : memref<128x128xf32, #tpu.memory_space<vmem>>, vector<128x128xf32>
      %cst_21 = arith.constant dense<0.000000e+00> : vector<8x128xf32>
      %56 = tpu.matmul %54, %55, %cst_21 {dimension_numbers = #tpu.dot_dimension_numbers<[1], [0], [0], [1], [0, 0, 1, 1], [], []>} : vector<8x128xf32>, vector<128x128xf32>, vector<8x128xf32> -> vector<8x128xf32>
      %c0_22 = arith.constant 0 : index
      %c0_23 = arith.constant 0 : index
      %57 = vector.load %arg6[%c0_22, %c0_23] : memref<1x128xf32, #tpu.memory_space<vmem>>, vector<1x128xf32>
      %58 = vector.broadcast %57 : vector<1x128xf32> to vector<8x128xf32>
      %59 = arith.addf %56, %58 : vector<8x128xf32>
      %cst_24 = arith.constant dense<0.000000e+00> : vector<128xf32>
      %60 = vector.multi_reduction <add>, %59, %cst_24 [0] : vector<8x128xf32> to vector<128xf32>
      %61 = vector.shape_cast %60 : vector<128xf32> to vector<1x128xf32>
      %cst_25 = arith.constant 8.000000e+00 : f32
      %62 = vector.broadcast %cst_25 : f32 to vector<1x128xf32>
      %63 = arith.divf %61, %62 : vector<1x128xf32>
      %64 = vector.broadcast %63 : vector<1x128xf32> to vector<8x128xf32>
      %65 = arith.subf %59, %64 : vector<8x128xf32>
      %66 = arith.mulf %65, %65 : vector<8x128xf32>
      %cst_26 = arith.constant dense<0.000000e+00> : vector<128xf32>
      %67 = vector.multi_reduction <add>, %66, %cst_26 [0] : vector<8x128xf32> to vector<128xf32>
      %68 = vector.shape_cast %67 : vector<128xf32> to vector<1x128xf32>
      %cst_27 = arith.constant 8.000000e+00 : f32
      %69 = vector.broadcast %cst_27 : f32 to vector<1x128xf32>
      %70 = arith.divf %68, %69 : vector<1x128xf32>
      %c0_28 = arith.constant 0 : index
      %c0_29 = arith.constant 0 : index
      %71 = vector.load %arg7[%c0_28, %c0_29] : memref<1x128xf32, #tpu.memory_space<vmem>>, vector<1x128xf32>
      %72 = vector.broadcast %63 : vector<1x128xf32> to vector<8x128xf32>
      %73 = arith.subf %59, %72 : vector<8x128xf32>
      %74 = vector.broadcast %71 : vector<1x128xf32> to vector<8x128xf32>
      %75 = arith.mulf %74, %73 : vector<8x128xf32>
      %cst_30 = arith.constant 9.99999974E-6 : f32
      %76 = vector.broadcast %cst_30 : f32 to vector<1x128xf32>
      %77 = arith.addf %70, %76 : vector<1x128xf32>
      %78 = math.rsqrt %77 : vector<1x128xf32>
      %79 = vector.broadcast %78 : vector<1x128xf32> to vector<8x128xf32>
      %80 = arith.mulf %75, %79 : vector<8x128xf32>
      %c0_31 = arith.constant 0 : index
      %c0_32 = arith.constant 0 : index
      %81 = vector.load %arg8[%c0_31, %c0_32] : memref<1x128xf32, #tpu.memory_space<vmem>>, vector<1x128xf32>
      %82 = vector.broadcast %81 : vector<1x128xf32> to vector<8x128xf32>
      %83 = arith.addf %80, %82 : vector<8x128xf32>
      %c0_33 = arith.constant 0 : index
      %c0_34 = arith.constant 0 : index
      %84 = vector.load %arg9[%c0_33, %c0_34] : memref<8x128xf32, #tpu.memory_space<vmem>>, vector<8x128xf32>
      tpu.vector_store %arg9[%c0_33, %c0_34], %83 {strides = array<i32>} : memref<8x128xf32, #tpu.memory_space<vmem>>, vector<8x128xf32>,
    } else {
    }
    return
  }
  func.func @transform_0(%arg0: i32, %arg1: i32) -> (i32, i32, i32) {
    %c0_i32 = arith.constant 0 : i32
    %c0_i32_0 = arith.constant 0 : i32
    return %arg0, %c0_i32, %arg1 : i32, i32, i32
  }
  func.func @transform_1(%arg0: i32, %arg1: i32) -> (i32, i32) {
    %c0_i32 = arith.constant 0 : i32
    %c0_i32_0 = arith.constant 0 : i32
    %c0_i32_1 = arith.constant 0 : i32
    return %c0_i32, %c0_i32_0 : i32, i32
  }
  func.func @transform_2(%arg0: i32, %arg1: i32) -> (i32, i32) {
    %c0_i32 = arith.constant 0 : i32
    %c0_i32_0 = arith.constant 0 : i32
    %c0_i32_1 = arith.constant 0 : i32
    return %c0_i32, %c0_i32_0 : i32, i32
  }
  func.func @transform_3(%arg0: i32, %arg1: i32) -> (i32, i32) {
    %c0_i32 = arith.constant 0 : i32
    %c0_i32_0 = arith.constant 0 : i32
    %c0_i32_1 = arith.constant 0 : i32
    return %c0_i32, %c0_i32_0 : i32, i32
  }
  func.func @transform_4(%arg0: i32, %arg1: i32) -> (i32, i32) {
    %c0_i32 = arith.constant 0 : i32
    %c0_i32_0 = arith.constant 0 : i32
    %c0_i32_1 = arith.constant 0 : i32
    return %c0_i32, %c0_i32_0 : i32, i32
  }
  func.func @transform_5(%arg0: i32, %arg1: i32) -> (i32, i32) {
    %c0_i32 = arith.constant 0 : i32
    %c0_i32_0 = arith.constant 0 : i32
    %c0_i32_1 = arith.constant 0 : i32
    return %c0_i32, %c0_i32_0 : i32, i32
  }
  func.func @transform_6(%arg0: i32, %arg1: i32) -> (i32, i32) {
    %c0_i32 = arith.constant 0 : i32
    %c0_i32_0 = arith.constant 0 : i32
    %c0_i32_1 = arith.constant 0 : i32
    return %c0_i32, %c0_i32_0 : i32, i32
  }
  func.func @transform_7(%arg0: i32, %arg1: i32) -> (i32, i32) {
    %c0_i32 = arith.constant 0 : i32
    %c0_i32_0 = arith.constant 0 : i32
    %c0_i32_1 = arith.constant 0 : i32
    return %c0_i32, %c0_i32_0 : i32, i32
  }
}

</mosaic_0001>

<llo_original>
// kernel: tpu_custom_call.1
$region0: #{tpu_custom_call.1}
  #allocation0 [shape = 'u32[]', space=smem, size = 0x4, offset = 0x4, fixed_abs, tag = 'smem constant byte address 0x4 - core index']
  #allocation1 [shape = 'u32[72,128]{1,0:T(1,128)}', space=vmem, size = 0x9000, scoped, tag = 'internal scratch']
  #allocation2 [shape = 'f32[128,8]{1,0:T(8,128)}', space=vmem, size = 0x10000, scoped, tag = 'scratch operand']
  %s0 = inlined_call_operand.vmem [shape: bf16[8,3,256], index: 0, kind: input, shape index: {}]
  %s1 = inlined_call_operand.vmem [shape: f32[128,3], index: 1, kind: input, shape index: {}]
  %s2 = inlined_call_operand.vmem [shape: f32[128,1], index: 2, kind: input, shape index: {}]
  %s3 = inlined_call_operand.vmem [shape: f32[128,128], index: 3, kind: input, shape index: {}]
  %s4 = inlined_call_operand.vmem [shape: f32[1,128], index: 4, kind: input, shape index: {}]
  %s5 = inlined_call_operand.vmem [shape: f32[1,128], index: 5, kind: input, shape index: {}]
  %s6 = inlined_call_operand.vmem [shape: f32[1,128], index: 6, kind: input, shape index: {}]
  %s7 = inlined_call_operand.hbm [shape: f32[8,128], index: 7, kind: output, shape index: {}]
  %s8 = sld [smem:[#allocation0]]
  $region69: #{tpu_custom_call.1} parent=0
    _
  %s10 = ssub.s32 1, %s8
  %s11 = scalar_select 0, %s10, %s8
  $region1: #{tpu_custom_call.1} parent=0
    #allocation3 [shape = 'u8[4096]{0}', space=vmem, size = 0x1000, scoped, tag = 'output window, operand 0, single buffered']
    #allocation4 [shape = 's32[2]{0}', space=sflag, size = 0x8, scoped, tag = 'scoped memory for tpu_custom_call.1']
    %12 = vsyncpa [#allocation4], 0
    loop: start=0, step=1, limit=18
    $region2: #{tpu_custom_call.1} parent=1 // loop_pre_header
      _
    $region3: #{tpu_custom_call.1} parent=1 // loop_header
      %s14 = sphi 0, %s18
      %p15 = scmp.ge.s32.totalorder %s14, 18
      %s21 = sphi 0, %s33
      %s22 = sphi 0, %s29
      %s23 = sphi 0, %s21
      %s24 = sphi 0, %s22
      %s25 = sphi 0, %s23
      %s26 = sphi 0, %s24
      %s38 = sphi 0, %s40
      %s41 = sphi 0, %s38
      %s42 = sphi 0, %s41
      %s58 = sphi 0, %s42
      %s62 = sphi 0, %s62
      %s64 = sphi 0, %s62
      %s65 = sphi 0, %s64
      %s79 = sphi 0, %s65
      %s83 = sphi 0, %s83
      %s85 = sphi 0, %s83
      %s86 = sphi 0, %s85
      %s100 = sphi 0, %s86
      %s104 = sphi 0, %s104
      %s106 = sphi 0, %s104
      %s107 = sphi 0, %s106
      %s121 = sphi 0, %s107
      %s125 = sphi 0, %s125
      %s127 = sphi 0, %s125
      %s128 = sphi 0, %s127
      %s142 = sphi 0, %s128
      %s146 = sphi 0, %s146
      %s148 = sphi 0, %s146
      %s149 = sphi 0, %s148
      %s163 = sphi 0, %s149
      %s167 = sphi 0, %s167
      %s169 = sphi 0, %s167
      %s170 = sphi 0, %s169
      %s184 = sphi 0, %s170
      %s188 = sphi 0, %s188
      %s190 = sphi 0, %s188
      %s191 = sphi 0, %s190
      %s205 = sphi 0, %s191
    $region4: #{tpu_custom_call.1} parent=1 // loop_header_branch
      %17 = sbr.rel (%p15) target = $region8
    $region5: #{tpu_custom_call.1} parent=1 // loop_body
      %s19 = ssub.s32 %s14, 1
      %s20 = ssub.s32 %s14, 2
      %s27 = sadd.s32 1, %s22
      %p28 = scmp.ge.s32.totalorder %s27, 2
      %s29 = scalar_select %p28, 0, %s27
      %s30 = sadd.s32 1, %s21
      %s31 = scalar_select %p28, %s30, %s21
      %p32 = scmp.ge.s32.totalorder %s31, 8
      %s33 = scalar_select %p32, 0, %s31
      %s34 = ssub.s32 %s21, %s33
      %s35 = ssub.s32 %s22, %s29
      %s36 = sor.u32 %s34, %s35
      %p37 = scmp.eq.s32.totalorder %s36, 0
      %s39 = sadd.s32 %s38, 1
      %s40 = scalar_select %p37, %s38, %s39
      %p43 = pneg %p37
      %p44 = scmp.eq.s32.totalorder %s14, 15
      %p45 = por %p43, %p44
      %p46 = scmp.ne.s32.totalorder %s38, %s41
      %p47 = scmp.eq.s32.totalorder %s14, 0
      %p48 = por %p46, %p47
      %p49 = scmp.ne.s32.totalorder %s38, %s41
      %p50 = scmp.eq.s32.totalorder %s19, 15
      %p51 = por %p49, %p50
      %p52 = scmp.ne.s32.totalorder %s41, %s42
      %p53 = scmp.eq.s32.totalorder %s19, 0
      %p54 = por %p52, %p53
      %p55 = scmp.ne.s32.totalorder %s41, %s42
      %p56 = scmp.eq.s32.totalorder %s20, 15
      %p57 = por %p55, %p56
      %p59 = scmp.ne.s32.totalorder %s42, %s58
      %p60 = scmp.eq.s32.totalorder %s20, 0
      %p61 = por %p59, %p60
      %s63 = sadd.s32 %s62, 1
      %p66 = scmp.eq.s32.totalorder %s14, 15
      %p67 = scmp.ne.s32.totalorder %s62, %s64
      %p68 = scmp.eq.s32.totalorder %s14, 0
      %p69 = por %p67, %p68
      %p70 = scmp.ne.s32.totalorder %s62, %s64
      %p71 = scmp.eq.s32.totalorder %s19, 15
      %p72 = por %p70, %p71
      %p73 = scmp.ne.s32.totalorder %s64, %s65
      %p74 = scmp.eq.s32.totalorder %s19, 0
      %p75 = por %p73, %p74
      %p76 = scmp.ne.s32.totalorder %s64, %s65
      %p77 = scmp.eq.s32.totalorder %s20, 15
      %p78 = por %p76, %p77
      %p80 = scmp.ne.s32.totalorder %s65, %s79
      %p81 = scmp.eq.s32.totalorder %s20, 0
      %p82 = por %p80, %p81
      %s84 = sadd.s32 %s83, 1
      %p87 = scmp.eq.s32.totalorder %s14, 15
      %p88 = scmp.ne.s32.totalorder %s83, %s85
      %p89 = scmp.eq.s32.totalorder %s14, 0
      %p90 = por %p88, %p89
      %p91 = scmp.ne.s32.totalorder %s83, %s85
      %p92 = scmp.eq.s32.totalorder %s19, 15
      %p93 = por %p91, %p92
      %p94 = scmp.ne.s32.totalorder %s85, %s86
      %p95 = scmp.eq.s32.totalorder %s19, 0
      %p96 = por %p94, %p95
      %p97 = scmp.ne.s32.totalorder %s85, %s86
      %p98 = scmp.eq.s32.totalorder %s20, 15
      %p99 = por %p97, %p98
      %p101 = scmp.ne.s32.totalorder %s86, %s100
      %p102 = scmp.eq.s32.totalorder %s20, 0
      %p103 = por %p101, %p102
      %s105 = sadd.s32 %s104, 1
      %p108 = scmp.eq.s32.totalorder %s14, 15
      %p109 = scmp.ne.s32.totalorder %s104, %s106
      %p110 = scmp.eq.s32.totalorder %s14, 0
      %p111 = por %p109, %p110
      %p112 = scmp.ne.s32.totalorder %s104, %s106
      %p113 = scmp.eq.s32.totalorder %s19, 15
      %p114 = por %p112, %p113
      %p115 = scmp.ne.s32.totalorder %s106, %s107
      %p116 = scmp.eq.s32.totalorder %s19, 0
      %p117 = por %p115, %p116
      %p118 = scmp.ne.s32.totalorder %s106, %s107
      %p119 = scmp.eq.s32.totalorder %s20, 15
      %p120 = por %p118, %p119
      %p122 = scmp.ne.s32.totalorder %s107, %s121
      %p123 = scmp.eq.s32.totalorder %s20, 0
      %p124 = por %p122, %p123
      %s126 = sadd.s32 %s125, 1
      %p129 = scmp.eq.s32.totalorder %s14, 15
      %p130 = scmp.ne.s32.totalorder %s125, %s127
      %p131 = scmp.eq.s32.totalorder %s14, 0
      %p132 = por %p130, %p131
      %p133 = scmp.ne.s32.totalorder %s125, %s127
      %p134 = scmp.eq.s32.totalorder %s19, 15
      %p135 = por %p133, %p134
      %p136 = scmp.ne.s32.totalorder %s127, %s128
      %p137 = scmp.eq.s32.totalorder %s19, 0
      %p138 = por %p136, %p137
      %p139 = scmp.ne.s32.totalorder %s127, %s128
      %p140 = scmp.eq.s32.totalorder %s20, 15
      %p141 = por %p139, %p140
      %p143 = scmp.ne.s32.totalorder %s128, %s142
      %p144 = scmp.eq.s32.totalorder %s20, 0
      %p145 = por %p143, %p144
      %s147 = sadd.s32 %s146, 1
      %p150 = scmp.eq.s32.totalorder %s14, 15
      %p151 = scmp.ne.s32.totalorder %s146, %s148
      %p152 = scmp.eq.s32.totalorder %s14, 0
      %p153 = por %p151, %p152
      %p154 = scmp.ne.s32.totalorder %s146, %s148
      %p155 = scmp.eq.s32.totalorder %s19, 15
      %p156 = por %p154, %p155
      %p157 = scmp.ne.s32.totalorder %s148, %s149
      %p158 = scmp.eq.s32.totalorder %s19, 0
      %p159 = por %p157, %p158
      %p160 = scmp.ne.s32.totalorder %s148, %s149
      %p161 = scmp.eq.s32.totalorder %s20, 15
      %p162 = por %p160, %p161
      %p164 = scmp.ne.s32.totalorder %s149, %s163
      %p165 = scmp.eq.s32.totalorder %s20, 0
      %p166 = por %p164, %p165
      %s168 = sadd.s32 %s167, 1
      %p171 = scmp.eq.s32.totalorder %s14, 15
      %p172 = scmp.ne.s32.totalorder %s167, %s169
      %p173 = scmp.eq.s32.totalorder %s14, 0
      %p174 = por %p172, %p173
      %p175 = scmp.ne.s32.totalorder %s167, %s169
      %p176 = scmp.eq.s32.totalorder %s19, 15
      %p177 = por %p175, %p176
      %p178 = scmp.ne.s32.totalorder %s169, %s170
      %p179 = scmp.eq.s32.totalorder %s19, 0
      %p180 = por %p178, %p179
      %p181 = scmp.ne.s32.totalorder %s169, %s170
      %p182 = scmp.eq.s32.totalorder %s20, 15
      %p183 = por %p181, %p182
      %p185 = scmp.ne.s32.totalorder %s170, %s184
      %p186 = scmp.eq.s32.totalorder %s20, 0
      %p187 = por %p185, %p186
      %s189 = sadd.s32 %s188, 1
      %p192 = scmp.eq.s32.totalorder %s14, 15
      %p193 = scmp.ne.s32.totalorder %s188, %s190
      %p194 = scmp.eq.s32.totalorder %s14, 0
      %p195 = por %p193, %p194
      %p196 = scmp.ne.s32.totalorder %s188, %s190
      %p197 = scmp.eq.s32.totalorder %s19, 15
      %p198 = por %p196, %p197
      %p199 = scmp.ne.s32.totalorder %s190, %s191
      %p200 = scmp.eq.s32.totalorder %s19, 0
      %p201 = por %p199, %p200
      %p202 = scmp.ne.s32.totalorder %s190, %s191
      %p203 = scmp.eq.s32.totalorder %s20, 15
      %p204 = por %p202, %p203
      %p206 = scmp.ne.s32.totalorder %s191, %s205
      %p207 = scmp.eq.s32.totalorder %s20, 0
      %p208 = por %p206, %p207
      %p209 = scmp.le.s32.totalorder 1, %s14
      %p210 = scmp.lt.s32.totalorder %s14, 17
      %p211 = pnand %p209, %p210
      %p212 = pneg %p211
      // Predicated region
      $region9: #{tpu_custom_call.1} parent=5 // pred_check
        _
      $region10: #{tpu_custom_call.1} parent=5 // pred_check_branch
        %214 = sbr.rel (%p211) target = $region12
      $region11: #{tpu_custom_call.1} parent=5 // pred_region
        %s215 = ssub.s32 %s14, 1
        // Predicated region
        $region13: #{tpu_custom_call.1} parent=11 // pred_check
          %p216 = pneg %p75
        $region14: #{tpu_custom_call.1} parent=11 // pred_check_branch
          %218 = sbr.rel (%p216) target = $region16
        $region15: #{tpu_custom_call.1} parent=11 // pred_region
          _
        $region16: #{tpu_custom_call.1} parent=11 // pred_fallthru
          _
        // Predicated region
        $region17: #{tpu_custom_call.1} parent=11 // pred_check
          %p219 = pneg %p96
        $region18: #{tpu_custom_call.1} parent=11 // pred_check_branch
          %221 = sbr.rel (%p219) target = $region20
        $region19: #{tpu_custom_call.1} parent=11 // pred_region
          _
        $region20: #{tpu_custom_call.1} parent=11 // pred_fallthru
          _
        // Predicated region
        $region21: #{tpu_custom_call.1} parent=11 // pred_check
          %p222 = pneg %p117
        $region22: #{tpu_custom_call.1} parent=11 // pred_check_branch
          %224 = sbr.rel (%p222) target = $region24
        $region23: #{tpu_custom_call.1} parent=11 // pred_region
          _
        $region24: #{tpu_custom_call.1} parent=11 // pred_fallthru
          _
        // Predicated region
        $region25: #{tpu_custom_call.1} parent=11 // pred_check
          %p225 = pneg %p138
        $region26: #{tpu_custom_call.1} parent=11 // pred_check_branch
          %227 = sbr.rel (%p225) target = $region28
        $region27: #{tpu_custom_call.1} parent=11 // pred_region
          _
        $region28: #{tpu_custom_call.1} parent=11 // pred_fallthru
          _
        // Predicated region
        $region29: #{tpu_custom_call.1} parent=11 // pred_check
          %p228 = pneg %p159
        $region30: #{tpu_custom_call.1} parent=11 // pred_check_branch
          %230 = sbr.rel (%p228) target = $region32
        $region31: #{tpu_custom_call.1} parent=11 // pred_region
          _
        $region32: #{tpu_custom_call.1} parent=11 // pred_fallthru
          _
        // Predicated region
        $region33: #{tpu_custom_call.1} parent=11 // pred_check
          %p231 = pneg %p180
        $region34: #{tpu_custom_call.1} parent=11 // pred_check_branch
          %233 = sbr.rel (%p231) target = $region36
        $region35: #{tpu_custom_call.1} parent=11 // pred_region
          _
        $region36: #{tpu_custom_call.1} parent=11 // pred_fallthru
          _
      $region12: #{tpu_custom_call.1} parent=5 // pred_fallthru
        _
      %p234 = scmp.lt.s32.totalorder %s14, 16
      // Predicated region
      $region37: #{tpu_custom_call.1} parent=5 // pred_check
        %p235 = pneg %p234
      $region38: #{tpu_custom_call.1} parent=5 // pred_check_branch
        %237 = sbr.rel (%p235) target = $region40
      $region39: #{tpu_custom_call.1} parent=5 // pred_region
        // Predicated region
        $region41: #{tpu_custom_call.1} parent=39 // pred_check
          %p238 = pneg %p48
        $region42: #{tpu_custom_call.1} parent=39 // pred_check_branch
          %240 = sbr.rel (%p238) target = $region44
        $region43: #{tpu_custom_call.1} parent=39 // pred_region
          %p241 = scmp.lt.s32.totalorder %s21, 7
          %s242 = scalar_select %p241, %s21, 7
          %p243 = scmp.lt.s32.totalorder %s22, 1
          %s244 = scalar_select %p243, %s22, 1
          %s245 = smul.addr %s242, 2
          %s246 = sadd.s32 %s244, %s245
          %s247 = smul.addr %s246, 2
          %s248 = scalar_lea.vmem %s0, %s247
        $region44: #{tpu_custom_call.1} parent=39 // pred_fallthru
          _
      $region40: #{tpu_custom_call.1} parent=5 // pred_fallthru
        _
      %p249 = scmp.le.s32.totalorder 1, %s14
      %p250 = scmp.lt.s32.totalorder %s14, 17
      %p251 = pnand %p249, %p250
      %p252 = pneg %p251
      // Predicated region
      $region45: #{tpu_custom_call.1} parent=5 // pred_check
        _
      $region46: #{tpu_custom_call.1} parent=5 // pred_check_branch
        %254 = sbr.rel (%p251) target = $region48
      $region47: #{tpu_custom_call.1} parent=5 // pred_region
        %s255 = ssub.s32 %s14, 1
        %p256 = scmp.lt.s32.totalorder %s23, 7
        %s257 = scalar_select %p256, %s23, 7
        %p258 = scmp.lt.s32.totalorder %s24, 1
        %s259 = scalar_select %p258, %s24, 1
        %s260 = smul.addr %s257, 2
        %s261 = sadd.s32 %s259, %s260
        %s262 = smul.addr %s261, 2
        %s263 = scalar_lea.vmem %s0, %s262
        %p264 = pneg %p54
        %p265 = pneg %p51
        %p266 = pneg %p75
        %p267 = pneg %p72
        %p268 = pneg %p96
        %p269 = pneg %p93
        %p270 = pneg %p117
        %p271 = pneg %p114
        %p272 = pneg %p138
        %p273 = pneg %p135
        %p274 = pneg %p159
        %p275 = pneg %p156
        %p276 = pneg %p180
        %p277 = pneg %p177
        %p278 = pneg %p201
        %p279 = pneg %p198
        %p280 = scmp.lt.s32.totalorder %s23, 7
        %s281 = scalar_select %p280, %s23, 7
        %p282 = scmp.lt.s32.totalorder %s24, 1
        %s283 = scalar_select %p282, %s24, 1
        %s284 = smul.addr %s281, 2
        %s285 = sadd.s32 %s283, %s284
        %s286 = smul.addr %s285, 2
        %s287 = scalar_lea.vmem %s0, %s286
        %p288 = scmp.eq.s32.totalorder %s23, 0
        %p289 = scmp.eq.s32.totalorder %s24, 0
        %p290 = pnand %p288, %p289
        %p291 = pneg %p290
        // Predicated region
        $region49: #{tpu_custom_call.1} parent=47 // pred_check
          _
        $region50: #{tpu_custom_call.1} parent=47 // pred_check_branch
          %293 = sbr.rel (%p290) target = $region52
        $region51: #{tpu_custom_call.1} parent=47 // pred_region
          %vm294 = vcmask 64512
          %295 = vst.msk [vmem:[#allocation2] sm:$0xff] %vm294, 0.0
          %296 = vst.msk [vmem:[#allocation2 + $0x8] sm:$0xff] %vm294, 0.0
          %297 = vst.msk [vmem:[#allocation2 + $0x10] sm:$0xff] %vm294, 0.0
          %298 = vst.msk [vmem:[#allocation2 + $0x18] sm:$0xff] %vm294, 0.0
          %299 = vst.msk [vmem:[#allocation2 + $0x20] sm:$0xff] %vm294, 0.0
          %300 = vst.msk [vmem:[#allocation2 + $0x28] sm:$0xff] %vm294, 0.0
          %301 = vst.msk [vmem:[#allocation2 + $0x30] sm:$0xff] %vm294, 0.0
          %302 = vst.msk [vmem:[#allocation2 + $0x38] sm:$0xff] %vm294, 0.0
          %303 = vst.msk [vmem:[#allocation2 + $0x40] sm:$0xff] %vm294, 0.0
          %304 = vst.msk [vmem:[#allocation2 + $0x48] sm:$0xff] %vm294, 0.0
          %305 = vst.msk [vmem:[#allocation2 + $0x50] sm:$0xff] %vm294, 0.0
          %306 = vst.msk [vmem:[#allocation2 + $0x58] sm:$0xff] %vm294, 0.0
          %307 = vst.msk [vmem:[#allocation2 + $0x60] sm:$0xff] %vm294, 0.0
          %308 = vst.msk [vmem:[#allocation2 + $0x68] sm:$0xff] %vm294, 0.0
          %309 = vst.msk [vmem:[#allocation2 + $0x70] sm:$0xff] %vm294, 0.0
          %310 = vst.msk [vmem:[#allocation2 + $0x78] sm:$0xff] %vm294, 0.0
        $region52: #{tpu_custom_call.1} parent=47 // pred_fallthru
          _
        %v311 = vld [vmem:[%s287] sm:$0x3]
        %v312 = vld [vmem:[%s1] sm:$0xff]
        %v313 = vld [vmem:[%s1 + $0x8] sm:$0xff]
        %v314 = vld [vmem:[%s1 + $0x10] sm:$0xff]
        %v315 = vld [vmem:[%s1 + $0x18] sm:$0xff]
        %v316 = vld [vmem:[%s1 + $0x20] sm:$0xff]
        %v317 = vld [vmem:[%s1 + $0x28] sm:$0xff]
        %v318 = vld [vmem:[%s1 + $0x30] sm:$0xff]
        %v319 = vld [vmem:[%s1 + $0x38] sm:$0xff]
        %v320 = vld [vmem:[%s1 + $0x40] sm:$0xff]
        %v321 = vld [vmem:[%s1 + $0x48] sm:$0xff]
        %v322 = vld [vmem:[%s1 + $0x50] sm:$0xff]
        %v323 = vld [vmem:[%s1 + $0x58] sm:$0xff]
        %v324 = vld [vmem:[%s1 + $0x60] sm:$0xff]
        %v325 = vld [vmem:[%s1 + $0x68] sm:$0xff]
        %v326 = vld [vmem:[%s1 + $0x70] sm:$0xff]
        %v327 = vld [vmem:[%s1 + $0x78] sm:$0xff]
        %v328 = vld [vmem:[%s2] sm:$0xff]
        %v329 = vld [vmem:[%s2 + $0x8] sm:$0xff]
        %v330 = vld [vmem:[%s2 + $0x10] sm:$0xff]
        %v331 = vld [vmem:[%s2 + $0x18] sm:$0xff]
        %v332 = vld [vmem:[%s2 + $0x20] sm:$0xff]
        %v333 = vld [vmem:[%s2 + $0x28] sm:$0xff]
        %v334 = vld [vmem:[%s2 + $0x30] sm:$0xff]
        %v335 = vld [vmem:[%s2 + $0x38] sm:$0xff]
        %v336 = vld [vmem:[%s2 + $0x40] sm:$0xff]
        %v337 = vld [vmem:[%s2 + $0x48] sm:$0xff]
        %v338 = vld [vmem:[%s2 + $0x50] sm:$0xff]
        %v339 = vld [vmem:[%s2 + $0x58] sm:$0xff]
        %v340 = vld [vmem:[%s2 + $0x60] sm:$0xff]
        %v341 = vld [vmem:[%s2 + $0x68] sm:$0xff]
        %v342 = vld [vmem:[%s2 + $0x70] sm:$0xff]
        %v343 = vld [vmem:[%s2 + $0x78] sm:$0xff]
        %345 = vset.pattern.permute.xlu0 0
        %346 = vperm.xlu0 %345, %v328
        %v347 = vpop.permute.xlu0 %346
        %350 = vset.pattern.permute.xlu0 0
        %351 = vperm.xlu0 %350, %v329
        %v352 = vpop.permute.xlu0 %351
        %355 = vset.pattern.permute.xlu0 0
        %356 = vperm.xlu0 %355, %v330
        %v357 = vpop.permute.xlu0 %356
        %360 = vset.pattern.permute.xlu0 0
        %361 = vperm.xlu0 %360, %v331
        %v362 = vpop.permute.xlu0 %361
        %365 = vset.pattern.permute.xlu0 0
        %366 = vperm.xlu0 %365, %v332
        %v367 = vpop.permute.xlu0 %366
        %370 = vset.pattern.permute.xlu0 0
        %371 = vperm.xlu0 %370, %v333
        %v372 = vpop.permute.xlu0 %371
        %375 = vset.pattern.permute.xlu0 0
        %376 = vperm.xlu0 %375, %v334
        %v377 = vpop.permute.xlu0 %376
        %380 = vset.pattern.permute.xlu0 0
        %381 = vperm.xlu0 %380, %v335
        %v382 = vpop.permute.xlu0 %381
        %385 = vset.pattern.permute.xlu0 0
        %386 = vperm.xlu0 %385, %v336
        %v387 = vpop.permute.xlu0 %386
        %390 = vset.pattern.permute.xlu0 0
        %391 = vperm.xlu0 %390, %v337
        %v392 = vpop.permute.xlu0 %391
        %395 = vset.pattern.permute.xlu0 0
        %396 = vperm.xlu0 %395, %v338
        %v397 = vpop.permute.xlu0 %396
        %400 = vset.pattern.permute.xlu0 0
        %401 = vperm.xlu0 %400, %v339
        %v402 = vpop.permute.xlu0 %401
        %405 = vset.pattern.permute.xlu0 0
        %406 = vperm.xlu0 %405, %v340
        %v407 = vpop.permute.xlu0 %406
        %410 = vset.pattern.permute.xlu0 0
        %411 = vperm.xlu0 %410, %v341
        %v412 = vpop.permute.xlu0 %411
        %415 = vset.pattern.permute.xlu0 0
        %416 = vperm.xlu0 %415, %v342
        %v417 = vpop.permute.xlu0 %416
        %420 = vset.pattern.permute.xlu0 0
        %421 = vperm.xlu0 %420, %v343
        %v422 = vpop.permute.xlu0 %421
        %v424 = vunpack.c.l.bf16 %v311
        %426 = vset.pattern.permute.xlu0 0
        %427 = vperm.xlu0 %426, %v312
        %v428 = vpop.permute.xlu0 %427
        %431 = vset.pattern.permute.xlu0 0
        %432 = vperm.xlu0 %431, %v313
        %v433 = vpop.permute.xlu0 %432
        %436 = vset.pattern.permute.xlu0 0
        %437 = vperm.xlu0 %436, %v314
        %v438 = vpop.permute.xlu0 %437
        %441 = vset.pattern.permute.xlu0 0
        %442 = vperm.xlu0 %441, %v315
        %v443 = vpop.permute.xlu0 %442
        %446 = vset.pattern.permute.xlu0 0
        %447 = vperm.xlu0 %446, %v316
        %v448 = vpop.permute.xlu0 %447
        %451 = vset.pattern.permute.xlu0 0
        %452 = vperm.xlu0 %451, %v317
        %v453 = vpop.permute.xlu0 %452
        %456 = vset.pattern.permute.xlu0 0
        %457 = vperm.xlu0 %456, %v318
        %v458 = vpop.permute.xlu0 %457
        %461 = vset.pattern.permute.xlu0 0
        %462 = vperm.xlu0 %461, %v319
        %v463 = vpop.permute.xlu0 %462
        %466 = vset.pattern.permute.xlu0 0
        %467 = vperm.xlu0 %466, %v320
        %v468 = vpop.permute.xlu0 %467
        %471 = vset.pattern.permute.xlu0 0
        %472 = vperm.xlu0 %471, %v321
        %v473 = vpop.permute.xlu0 %472
        %476 = vset.pattern.permute.xlu0 0
        %477 = vperm.xlu0 %476, %v322
        %v478 = vpop.permute.xlu0 %477
        %481 = vset.pattern.permute.xlu0 0
        %482 = vperm.xlu0 %481, %v323
        %v483 = vpop.permute.xlu0 %482
        %486 = vset.pattern.permute.xlu0 0
        %487 = vperm.xlu0 %486, %v324
        %v488 = vpop.permute.xlu0 %487
        %491 = vset.pattern.permute.xlu0 0
        %492 = vperm.xlu0 %491, %v325
        %v493 = vpop.permute.xlu0 %492
        %496 = vset.pattern.permute.xlu0 0
        %497 = vperm.xlu0 %496, %v326
        %v498 = vpop.permute.xlu0 %497
        %501 = vset.pattern.permute.xlu0 0
        %502 = vperm.xlu0 %501, %v327
        %v503 = vpop.permute.xlu0 %502
        %v505 = vperm.slane %v424, 0
        %v506 = vmul.f32 %v428, %v505
        %v507 = vmul.f32 %v433, %v505
        %v508 = vmul.f32 %v438, %v505
        %v509 = vmul.f32 %v443, %v505
        %v510 = vmul.f32 %v448, %v505
        %v511 = vmul.f32 %v453, %v505
        %v512 = vmul.f32 %v458, %v505
        %v513 = vmul.f32 %v463, %v505
        %v514 = vmul.f32 %v468, %v505
        %v515 = vmul.f32 %v473, %v505
        %v516 = vmul.f32 %v478, %v505
        %v517 = vmul.f32 %v483, %v505
        %v518 = vmul.f32 %v488, %v505
        %v519 = vmul.f32 %v493, %v505
        %v520 = vmul.f32 %v498, %v505
        %v521 = vmul.f32 %v503, %v505
        %v522 = vadd.f32 %v347, %v506
        %v523 = vadd.f32 %v352, %v507
        %v524 = vadd.f32 %v357, %v508
        %v525 = vadd.f32 %v362, %v509
        %v526 = vadd.f32 %v367, %v510
        %v527 = vadd.f32 %v372, %v511
        %v528 = vadd.f32 %v377, %v512
        %v529 = vadd.f32 %v382, %v513
        %v530 = vadd.f32 %v387, %v514
        %v531 = vadd.f32 %v392, %v515
        %v532 = vadd.f32 %v397, %v516
        %v533 = vadd.f32 %v402, %v517
        %v534 = vadd.f32 %v407, %v518
        %v535 = vadd.f32 %v412, %v519
        %v536 = vadd.f32 %v417, %v520
        %v537 = vadd.f32 %v422, %v521
        %538 = vset.pattern.permute.xlu0 1
        %539 = vperm.xlu0 %538, %v312
        %v540 = vpop.permute.xlu0 %539
        %542 = vset.pattern.permute.xlu0 1
        %543 = vperm.xlu0 %542, %v313
        %v544 = vpop.permute.xlu0 %543
        %546 = vset.pattern.permute.xlu0 1
        %547 = vperm.xlu0 %546, %v314
        %v548 = vpop.permute.xlu0 %547
        %550 = vset.pattern.permute.xlu0 1
        %551 = vperm.xlu0 %550, %v315
        %v552 = vpop.permute.xlu0 %551
        %554 = vset.pattern.permute.xlu0 1
        %555 = vperm.xlu0 %554, %v316
        %v556 = vpop.permute.xlu0 %555
        %558 = vset.pattern.permute.xlu0 1
        %559 = vperm.xlu0 %558, %v317
        %v560 = vpop.permute.xlu0 %559
        %562 = vset.pattern.permute.xlu0 1
        %563 = vperm.xlu0 %562, %v318
        %v564 = vpop.permute.xlu0 %563
        %566 = vset.pattern.permute.xlu0 1
        %567 = vperm.xlu0 %566, %v319
        %v568 = vpop.permute.xlu0 %567
        %570 = vset.pattern.permute.xlu0 1
        %571 = vperm.xlu0 %570, %v320
        %v572 = vpop.permute.xlu0 %571
        %574 = vset.pattern.permute.xlu0 1
        %575 = vperm.xlu0 %574, %v321
        %v576 = vpop.permute.xlu0 %575
        %578 = vset.pattern.permute.xlu0 1
        %579 = vperm.xlu0 %578, %v322
        %v580 = vpop.permute.xlu0 %579
        %582 = vset.pattern.permute.xlu0 1
        %583 = vperm.xlu0 %582, %v323
        %v584 = vpop.permute.xlu0 %583
        %586 = vset.pattern.permute.xlu0 1
        %587 = vperm.xlu0 %586, %v324
        %v588 = vpop.permute.xlu0 %587
        %590 = vset.pattern.permute.xlu0 1
        %591 = vperm.xlu0 %590, %v325
        %v592 = vpop.permute.xlu0 %591
        %594 = vset.pattern.permute.xlu0 1
        %595 = vperm.xlu0 %594, %v326
        %v596 = vpop.permute.xlu0 %595
        %598 = vset.pattern.permute.xlu0 1
        %599 = vperm.xlu0 %598, %v327
        %v600 = vpop.permute.xlu0 %599
        %v602 = vperm.slane %v424, 1
        %v603 = vmul.f32 %v540, %v602
        %v604 = vmul.f32 %v544, %v602
        %v605 = vmul.f32 %v548, %v602
        %v606 = vmul.f32 %v552, %v602
        %v607 = vmul.f32 %v556, %v602
        %v608 = vmul.f32 %v560, %v602
        %v609 = vmul.f32 %v564, %v602
        %v610 = vmul.f32 %v568, %v602
        %v611 = vmul.f32 %v572, %v602
        %v612 = vmul.f32 %v576, %v602
        %v613 = vmul.f32 %v580, %v602
        %v614 = vmul.f32 %v584, %v602
        %v615 = vmul.f32 %v588, %v602
        %v616 = vmul.f32 %v592, %v602
        %v617 = vmul.f32 %v596, %v602
        %v618 = vmul.f32 %v600, %v602
        %v619 = vadd.f32 %v522, %v603
        %v620 = vadd.f32 %v523, %v604
        %v621 = vadd.f32 %v524, %v605
        %v622 = vadd.f32 %v525, %v606
        %v623 = vadd.f32 %v526, %v607
        %v624 = vadd.f32 %v527, %v608
        %v625 = vadd.f32 %v528, %v609
        %v626 = vadd.f32 %v529, %v610
        %v627 = vadd.f32 %v530, %v611
        %v628 = vadd.f32 %v531, %v612
        %v629 = vadd.f32 %v532, %v613
        %v630 = vadd.f32 %v533, %v614
        %v631 = vadd.f32 %v534, %v615
        %v632 = vadd.f32 %v535, %v616
        %v633 = vadd.f32 %v536, %v617
        %v634 = vadd.f32 %v537, %v618
        %635 = vset.pattern.permute.xlu0 2
        %636 = vperm.xlu0 %635, %v312
        %v637 = vpop.permute.xlu0 %636
        %639 = vset.pattern.permute.xlu0 2
        %640 = vperm.xlu0 %639, %v313
        %v641 = vpop.permute.xlu0 %640
        %643 = vset.pattern.permute.xlu0 2
        %644 = vperm.xlu0 %643, %v314
        %v645 = vpop.permute.xlu0 %644
        %647 = vset.pattern.permute.xlu0 2
        %648 = vperm.xlu0 %647, %v315
        %v649 = vpop.permute.xlu0 %648
        %651 = vset.pattern.permute.xlu0 2
        %652 = vperm.xlu0 %651, %v316
        %v653 = vpop.permute.xlu0 %652
        %655 = vset.pattern.permute.xlu0 2
        %656 = vperm.xlu0 %655, %v317
        %v657 = vpop.permute.xlu0 %656
        %659 = vset.pattern.permute.xlu0 2
        %660 = vperm.xlu0 %659, %v318
        %v661 = vpop.permute.xlu0 %660
        %663 = vset.pattern.permute.xlu0 2
        %664 = vperm.xlu0 %663, %v319
        %v665 = vpop.permute.xlu0 %664
        %667 = vset.pattern.permute.xlu0 2
        %668 = vperm.xlu0 %667, %v320
        %v669 = vpop.permute.xlu0 %668
        %671 = vset.pattern.permute.xlu0 2
        %672 = vperm.xlu0 %671, %v321
        %v673 = vpop.permute.xlu0 %672
        %675 = vset.pattern.permute.xlu0 2
        %676 = vperm.xlu0 %675, %v322
        %v677 = vpop.permute.xlu0 %676
        %679 = vset.pattern.permute.xlu0 2
        %680 = vperm.xlu0 %679, %v323
        %v681 = vpop.permute.xlu0 %680
        %683 = vset.pattern.permute.xlu0 2
        %684 = vperm.xlu0 %683, %v324
        %v685 = vpop.permute.xlu0 %684
        %687 = vset.pattern.permute.xlu0 2
        %688 = vperm.xlu0 %687, %v325
        %v689 = vpop.permute.xlu0 %688
        %691 = vset.pattern.permute.xlu0 2
        %692 = vperm.xlu0 %691, %v326
        %v693 = vpop.permute.xlu0 %692
        %695 = vset.pattern.permute.xlu0 2
        %696 = vperm.xlu0 %695, %v327
        %v697 = vpop.permute.xlu0 %696
        %v699 = vperm.slane %v424, 2
        %v700 = vmul.f32 %v637, %v699
        %v701 = vmul.f32 %v641, %v699
        %v702 = vmul.f32 %v645, %v699
        %v703 = vmul.f32 %v649, %v699
        %v704 = vmul.f32 %v653, %v699
        %v705 = vmul.f32 %v657, %v699
        %v706 = vmul.f32 %v661, %v699
        %v707 = vmul.f32 %v665, %v699
        %v708 = vmul.f32 %v669, %v699
        %v709 = vmul.f32 %v673, %v699
        %v710 = vmul.f32 %v677, %v699
        %v711 = vmul.f32 %v681, %v699
        %v712 = vmul.f32 %v685, %v699
        %v713 = vmul.f32 %v689, %v699
        %v714 = vmul.f32 %v693, %v699
        %v715 = vmul.f32 %v697, %v699
        %v716 = vadd.f32 %v619, %v700
        %v717 = vadd.f32 %v620, %v701
        %v718 = vadd.f32 %v621, %v702
        %v719 = vadd.f32 %v622, %v703
        %v720 = vadd.f32 %v623, %v704
        %v721 = vadd.f32 %v624, %v705
        %v722 = vadd.f32 %v625, %v706
        %v723 = vadd.f32 %v626, %v707
        %v724 = vadd.f32 %v627, %v708
        %v725 = vadd.f32 %v628, %v709
        %v726 = vadd.f32 %v629, %v710
        %v727 = vadd.f32 %v630, %v711
        %v728 = vadd.f32 %v631, %v712
        %v729 = vadd.f32 %v632, %v713
        %v730 = vadd.f32 %v633, %v714
        %v731 = vadd.f32 %v634, %v715
        %v732 = vmax.f32 %v716, 0.0
        %v733 = vmax.f32 %v717, 0.0
        %v734 = vmax.f32 %v718, 0.0
        %v735 = vmax.f32 %v719, 0.0
        %v736 = vmax.f32 %v720, 0.0
        %v737 = vmax.f32 %v721, 0.0
        %v738 = vmax.f32 %v722, 0.0
        %v739 = vmax.f32 %v723, 0.0
        %v740 = vmax.f32 %v724, 0.0
        %v741 = vmax.f32 %v725, 0.0
        %v742 = vmax.f32 %v726, 0.0
        %v743 = vmax.f32 %v727, 0.0
        %v744 = vmax.f32 %v728, 0.0
        %v745 = vmax.f32 %v729, 0.0
        %v746 = vmax.f32 %v730, 0.0
        %v747 = vmax.f32 %v731, 0.0
        %748 = vmatpush.msra.mxu0 1.0
        %749 = vmatpush.msra.mxu0 1.0
        %750 = vmatpush.msra.mxu0 1.0
        %751 = vmatpush.msra.mxu0 1.0
        %752 = vmatpush.msra.mxu0 1.0
        %753 = vmatpush.msra.mxu0 1.0
        %754 = vmatpush.msra.mxu0 1.0
        %755 = vmatpush.msra.mxu0 1.0
        %756 = vmatpush.msra.mxu0 1.0
        %757 = vmatpush.msra.mxu0 1.0
        %758 = vmatpush.msra.mxu0 1.0
        %759 = vmatpush.msra.mxu0 1.0
        %760 = vmatpush.msra.mxu0 1.0
        %761 = vmatpush.msra.mxu0 1.0
        %762 = vmatpush.msra.mxu0 1.0
        %763 = vmatpush.msra.mxu0 1.0
        %764 = vmatmul.f32.gmra.mxu0 %v732
        %v765 = vpop.f32.mrf.mxu0
        %v766 = vadd.f32 0.0, %v765
        %767 = vmatmul.f32.gmra.mxu0 %v733
        %v768 = vpop.f32.mrf.mxu0
        %v769 = vadd.f32 0.0, %v768
        %770 = vmatmul.f32.gmra.mxu0 %v734
        %v771 = vpop.f32.mrf.mxu0
        %v772 = vadd.f32 0.0, %v771
        %773 = vmatmul.f32.gmra.mxu0 %v735
        %v774 = vpop.f32.mrf.mxu0
        %v775 = vadd.f32 0.0, %v774
        %776 = vmatmul.f32.gmra.mxu0 %v736
        %v777 = vpop.f32.mrf.mxu0
        %v778 = vadd.f32 0.0, %v777
        %779 = vmatmul.f32.gmra.mxu0 %v737
        %v780 = vpop.f32.mrf.mxu0
        %v781 = vadd.f32 0.0, %v780
        %782 = vmatmul.f32.gmra.mxu0 %v738
        %v783 = vpop.f32.mrf.mxu0
        %v784 = vadd.f32 0.0, %v783
        %785 = vmatmul.f32.gmra.mxu0 %v739
        %v786 = vpop.f32.mrf.mxu0
        %v787 = vadd.f32 0.0, %v786
        %788 = vmatmul.f32.gmra.mxu0 %v740
        %v789 = vpop.f32.mrf.mxu0
        %v790 = vadd.f32 0.0, %v789
        %791 = vmatmul.f32.gmra.mxu0 %v741
        %v792 = vpop.f32.mrf.mxu0
        %v793 = vadd.f32 0.0, %v792
        %794 = vmatmul.f32.gmra.mxu0 %v742
        %v795 = vpop.f32.mrf.mxu0
        %v796 = vadd.f32 0.0, %v795
        %797 = vmatmul.f32.gmra.mxu0 %v743
        %v798 = vpop.f32.mrf.mxu0
        %v799 = vadd.f32 0.0, %v798
        %800 = vmatmul.f32.gmra.mxu0 %v744
        %v801 = vpop.f32.mrf.mxu0
        %v802 = vadd.f32 0.0, %v801
        %803 = vmatmul.f32.gmra.mxu0 %v745
        %v804 = vpop.f32.mrf.mxu0
        %v805 = vadd.f32 0.0, %v804
        %806 = vmatmul.f32.gmra.mxu0 %v746
        %v807 = vpop.f32.mrf.mxu0
        %v808 = vadd.f32 0.0, %v807
        %809 = vmatmul.f32.gmra.mxu0 %v747
        %v810 = vpop.f32.mrf.mxu0
        %v811 = vadd.f32 0.0, %v810
        %812 = vdwg.mxu0
        %v813 = vlaneseq
        %v814 = vand.u32 %v813, 127
        %v815 = vld [vmem:[#allocation2] sm:$0xff]
        %v816 = vld [vmem:[#allocation2 + $0x8] sm:$0xff]
        %v817 = vld [vmem:[#allocation2 + $0x10] sm:$0xff]
        %v818 = vld [vmem:[#allocation2 + $0x18] sm:$0xff]
        %v819 = vld [vmem:[#allocation2 + $0x20] sm:$0xff]
        %v820 = vld [vmem:[#allocation2 + $0x28] sm:$0xff]
        %v821 = vld [vmem:[#allocation2 + $0x30] sm:$0xff]
        %v822 = vld [vmem:[#allocation2 + $0x38] sm:$0xff]
        %v823 = vld [vmem:[#allocation2 + $0x40] sm:$0xff]
        %v824 = vld [vmem:[#allocation2 + $0x48] sm:$0xff]
        %v825 = vld [vmem:[#allocation2 + $0x50] sm:$0xff]
        %v826 = vld [vmem:[#allocation2 + $0x58] sm:$0xff]
        %v827 = vld [vmem:[#allocation2 + $0x60] sm:$0xff]
        %v828 = vld [vmem:[#allocation2 + $0x68] sm:$0xff]
        %v829 = vld [vmem:[#allocation2 + $0x70] sm:$0xff]
        %v830 = vld [vmem:[#allocation2 + $0x78] sm:$0xff]
        %v831 = vstv %s23
        %vm832 = vcmp.eq.s32.totalorder %v814, %v831
        %834 = vset.pattern.permute.xlu0 0
        %835 = vperm.xlu0 %834, %v766
        %v836 = vpop.permute.xlu0 %835
        %839 = vset.pattern.permute.xlu0 0
        %840 = vperm.xlu0 %839, %v769
        %v841 = vpop.permute.xlu0 %840
        %844 = vset.pattern.permute.xlu0 0
        %845 = vperm.xlu0 %844, %v772
        %v846 = vpop.permute.xlu0 %845
        %849 = vset.pattern.permute.xlu0 0
        %850 = vperm.xlu0 %849, %v775
        %v851 = vpop.permute.xlu0 %850
        %854 = vset.pattern.permute.xlu0 0
        %855 = vperm.xlu0 %854, %v778
        %v856 = vpop.permute.xlu0 %855
        %859 = vset.pattern.permute.xlu0 0
        %860 = vperm.xlu0 %859, %v781
        %v861 = vpop.permute.xlu0 %860
        %864 = vset.pattern.permute.xlu0 0
        %865 = vperm.xlu0 %864, %v784
        %v866 = vpop.permute.xlu0 %865
        %869 = vset.pattern.permute.xlu0 0
        %870 = vperm.xlu0 %869, %v787
        %v871 = vpop.permute.xlu0 %870
        %874 = vset.pattern.permute.xlu0 0
        %875 = vperm.xlu0 %874, %v790
        %v876 = vpop.permute.xlu0 %875
        %879 = vset.pattern.permute.xlu0 0
        %880 = vperm.xlu0 %879, %v793
        %v881 = vpop.permute.xlu0 %880
        %884 = vset.pattern.permute.xlu0 0
        %885 = vperm.xlu0 %884, %v796
        %v886 = vpop.permute.xlu0 %885
        %889 = vset.pattern.permute.xlu0 0
        %890 = vperm.xlu0 %889, %v799
        %v891 = vpop.permute.xlu0 %890
        %894 = vset.pattern.permute.xlu0 0
        %895 = vperm.xlu0 %894, %v802
        %v896 = vpop.permute.xlu0 %895
        %899 = vset.pattern.permute.xlu0 0
        %900 = vperm.xlu0 %899, %v805
        %v901 = vpop.permute.xlu0 %900
        %904 = vset.pattern.permute.xlu0 0
        %905 = vperm.xlu0 %904, %v808
        %v906 = vpop.permute.xlu0 %905
        %909 = vset.pattern.permute.xlu0 0
        %910 = vperm.xlu0 %909, %v811
        %v911 = vpop.permute.xlu0 %910
        %v913 = vsel %vm832, %v836, 0.0
        %v914 = vsel %vm832, %v841, 0.0
        %v915 = vsel %vm832, %v846, 0.0
        %v916 = vsel %vm832, %v851, 0.0
        %v917 = vsel %vm832, %v856, 0.0
        %v918 = vsel %vm832, %v861, 0.0
        %v919 = vsel %vm832, %v866, 0.0
        %v920 = vsel %vm832, %v871, 0.0
        %v921 = vsel %vm832, %v876, 0.0
        %v922 = vsel %vm832, %v881, 0.0
        %v923 = vsel %vm832, %v886, 0.0
        %v924 = vsel %vm832, %v891, 0.0
        %v925 = vsel %vm832, %v896, 0.0
        %v926 = vsel %vm832, %v901, 0.0
        %v927 = vsel %vm832, %v906, 0.0
        %v928 = vsel %vm832, %v911, 0.0
        %v929 = vadd.f32 %v815, %v913
        %v930 = vadd.f32 %v816, %v914
        %v931 = vadd.f32 %v817, %v915
        %v932 = vadd.f32 %v818, %v916
        %v933 = vadd.f32 %v819, %v917
        %v934 = vadd.f32 %v820, %v918
        %v935 = vadd.f32 %v821, %v919
        %v936 = vadd.f32 %v822, %v920
        %v937 = vadd.f32 %v823, %v921
        %v938 = vadd.f32 %v824, %v922
        %v939 = vadd.f32 %v825, %v923
        %v940 = vadd.f32 %v826, %v924
        %v941 = vadd.f32 %v827, %v925
        %v942 = vadd.f32 %v828, %v926
        %v943 = vadd.f32 %v829, %v927
        %v944 = vadd.f32 %v830, %v928
        %vm945 = vcmask 64512
        %946 = vst.msk [vmem:[#allocation2] sm:$0xff] %vm945, %v929
        %947 = vst.msk [vmem:[#allocation2 + $0x8] sm:$0xff] %vm945, %v930
        %948 = vst.msk [vmem:[#allocation2 + $0x10] sm:$0xff] %vm945, %v931
        %949 = vst.msk [vmem:[#allocation2 + $0x18] sm:$0xff] %vm945, %v932
        %950 = vst.msk [vmem:[#allocation2 + $0x20] sm:$0xff] %vm945, %v933
        %951 = vst.msk [vmem:[#allocation2 + $0x28] sm:$0xff] %vm945, %v934
        %952 = vst.msk [vmem:[#allocation2 + $0x30] sm:$0xff] %vm945, %v935
        %953 = vst.msk [vmem:[#allocation2 + $0x38] sm:$0xff] %vm945, %v936
        %954 = vst.msk [vmem:[#allocation2 + $0x40] sm:$0xff] %vm945, %v937
        %955 = vst.msk [vmem:[#allocation2 + $0x48] sm:$0xff] %vm945, %v938
        %956 = vst.msk [vmem:[#allocation2 + $0x50] sm:$0xff] %vm945, %v939
        %957 = vst.msk [vmem:[#allocation2 + $0x58] sm:$0xff] %vm945, %v940
        %958 = vst.msk [vmem:[#allocation2 + $0x60] sm:$0xff] %vm945, %v941
        %959 = vst.msk [vmem:[#allocation2 + $0x68] sm:$0xff] %vm945, %v942
        %960 = vst.msk [vmem:[#allocation2 + $0x70] sm:$0xff] %vm945, %v943
        %961 = vst.msk [vmem:[#allocation2 + $0x78] sm:$0xff] %vm945, %v944
        %p962 = scmp.eq.s32.totalorder %s23, 7
        %p963 = scmp.eq.s32.totalorder %s24, 1
        %p964 = pnand %p962, %p963
        %p965 = pneg %p964
        // Predicated region
        $region53: #{tpu_custom_call.1} parent=47 // pred_check
          _
        $region54: #{tpu_custom_call.1} parent=47 // pred_check_branch
          %967 = sbr.rel (%p964) target = $region56
        $region55: #{tpu_custom_call.1} parent=47 // pred_region
          %v968 = vld [vmem:[#allocation2] sm:$0xff]
          %v969 = vld [vmem:[#allocation2 + $0x8] sm:$0xff]
          %v970 = vld [vmem:[#allocation2 + $0x10] sm:$0xff]
          %v971 = vld [vmem:[#allocation2 + $0x18] sm:$0xff]
          %v972 = vld [vmem:[#allocation2 + $0x20] sm:$0xff]
          %v973 = vld [vmem:[#allocation2 + $0x28] sm:$0xff]
          %v974 = vld [vmem:[#allocation2 + $0x30] sm:$0xff]
          %v975 = vld [vmem:[#allocation2 + $0x38] sm:$0xff]
          %v976 = vld [vmem:[#allocation2 + $0x40] sm:$0xff]
          %v977 = vld [vmem:[#allocation2 + $0x48] sm:$0xff]
          %v978 = vld [vmem:[#allocation2 + $0x50] sm:$0xff]
          %v979 = vld [vmem:[#allocation2 + $0x58] sm:$0xff]
          %v980 = vld [vmem:[#allocation2 + $0x60] sm:$0xff]
          %v981 = vld [vmem:[#allocation2 + $0x68] sm:$0xff]
          %v982 = vld [vmem:[#allocation2 + $0x70] sm:$0xff]
          %v983 = vld [vmem:[#allocation2 + $0x78] sm:$0xff]
          %v984 = vmul.f32 %v968, 0.00390625
          %v985 = vmul.f32 %v969, 0.00390625
          %v986 = vmul.f32 %v970, 0.00390625
          %v987 = vmul.f32 %v971, 0.00390625
          %v988 = vmul.f32 %v972, 0.00390625
          %v989 = vmul.f32 %v973, 0.00390625
          %v990 = vmul.f32 %v974, 0.00390625
          %v991 = vmul.f32 %v975, 0.00390625
          %v992 = vmul.f32 %v976, 0.00390625
          %v993 = vmul.f32 %v977, 0.00390625
          %v994 = vmul.f32 %v978, 0.00390625
          %v995 = vmul.f32 %v979, 0.00390625
          %v996 = vmul.f32 %v980, 0.00390625
          %v997 = vmul.f32 %v981, 0.00390625
          %v998 = vmul.f32 %v982, 0.00390625
          %v999 = vmul.f32 %v983, 0.00390625
          %1000 = vxpose.xlu0.b32.start [1/16] %v984, 128
          %1001 = vxpose.xlu0.b32.cont [2/16] %v985, 128
          %1002 = vxpose.xlu0.b32.cont [3/16] %v986, 128
          %1003 = vxpose.xlu0.b32.cont [4/16] %v987, 128
          %1004 = vxpose.xlu0.b32.cont [5/16] %v988, 128
          %1005 = vxpose.xlu0.b32.cont [6/16] %v989, 128
          %1006 = vxpose.xlu0.b32.cont [7/16] %v990, 128
          %1007 = vxpose.xlu0.b32.cont [8/16] %v991, 128
          %1008 = vxpose.xlu0.b32.cont [9/16] %v992, 128
          %1009 = vxpose.xlu0.b32.cont [10/16] %v993, 128
          %1010 = vxpose.xlu0.b32.cont [11/16] %v994, 128
          %1011 = vxpose.xlu0.b32.cont [12/16] %v995, 128
          %1012 = vxpose.xlu0.b32.cont [13/16] %v996, 128
          %1013 = vxpose.xlu0.b32.cont [14/16] %v997, 128
          %1014 = vxpose.xlu0.b32.cont [15/16] %v998, 128
          %1015 = vxpose.xlu0.b32.end [16/16] %v999, 128
          %v1016 = vpop.trf.xlu0
          %v1017 = vpop.trf.xlu0
          %v1018 = vpop.trf.xlu0
          %v1019 = vpop.trf.xlu0
          %v1020 = vpop.trf.xlu0
          %v1021 = vpop.trf.xlu0
          %v1022 = vpop.trf.xlu0
          %v1023 = vpop.trf.xlu0
          %v1024 = vpop.trf.xlu0
          %v1025 = vpop.trf.xlu0
          %v1026 = vpop.trf.xlu0
          %v1027 = vpop.trf.xlu0
          %v1028 = vpop.trf.xlu0
          %v1029 = vpop.trf.xlu0
          %v1030 = vpop.trf.xlu0
          %v1031 = vpop.trf.xlu0
          %v1032 = vld [vmem:[%s3] sm:$0xff]
          %v1033 = vld [vmem:[%s3 + $0x8] sm:$0xff]
          %v1034 = vld [vmem:[%s3 + $0x10] sm:$0xff]
          %v1035 = vld [vmem:[%s3 + $0x18] sm:$0xff]
          %v1036 = vld [vmem:[%s3 + $0x20] sm:$0xff]
          %v1037 = vld [vmem:[%s3 + $0x28] sm:$0xff]
          %v1038 = vld [vmem:[%s3 + $0x30] sm:$0xff]
          %v1039 = vld [vmem:[%s3 + $0x38] sm:$0xff]
          %v1040 = vld [vmem:[%s3 + $0x40] sm:$0xff]
          %v1041 = vld [vmem:[%s3 + $0x48] sm:$0xff]
          %v1042 = vld [vmem:[%s3 + $0x50] sm:$0xff]
          %v1043 = vld [vmem:[%s3 + $0x58] sm:$0xff]
          %v1044 = vld [vmem:[%s3 + $0x60] sm:$0xff]
          %v1045 = vld [vmem:[%s3 + $0x68] sm:$0xff]
          %v1046 = vld [vmem:[%s3 + $0x70] sm:$0xff]
          %v1047 = vld [vmem:[%s3 + $0x78] sm:$0xff]
          %v1048 = vld [vmem:[%s4] sm:$0x1]
          %v1050 = vperm.slane %v1048, 0
          %1052 = vmatpush.msra.mxu0 %v1047
          %1053 = vmatpush.msra.mxu0 %v1046
          %1054 = vmatpush.msra.mxu0 %v1045
          %1055 = vmatpush.msra.mxu0 %v1044
          %1056 = vmatpush.msra.mxu0 %v1043
          %1057 = vmatpush.msra.mxu0 %v1042
          %1058 = vmatpush.msra.mxu0 %v1041
          %1059 = vmatpush.msra.mxu0 %v1040
          %1060 = vmatpush.msra.mxu0 %v1039
          %1061 = vmatpush.msra.mxu0 %v1038
          %1062 = vmatpush.msra.mxu0 %v1037
          %1063 = vmatpush.msra.mxu0 %v1036
          %1064 = vmatpush.msra.mxu0 %v1035
          %1065 = vmatpush.msra.mxu0 %v1034
          %1066 = vmatpush.msra.mxu0 %v1033
          %1067 = vmatpush.msra.mxu0 %v1032
          %1068 = vmatmul.f32.gmra.mxu0 %v1016
          %v1069 = vpop.f32.mrf.mxu0
          %v1070 = vadd.f32 %v1050, %v1069
          %1071 = vdwg.mxu0
          %v1072 = vrot.slane %v1070, 4
          %v1073 = vadd.f32 %v1070, %v1072
          %v1074 = vrot.slane %v1073, 2
          %v1075 = vadd.f32 %v1073, %v1074
          %v1076 = vrot.slane %v1075, 1
          %v1077 = vadd.f32 %v1075, %v1076
          %v1078 = vrcp.pop 8.0
          %v1079 = vmul.f32 8.0, %v1078
          %v1080 = vsub.f32 1.0, %v1079
          %v1081 = vmul.f32 %v1078, %v1080
          %v1082 = vadd.f32 %v1078, %v1081
          %vm1083 = vweird.f32 %v1078
          %v1084 = vsel %vm1083, %v1078, %v1082
          %v1085 = vmul.f32 %v1077, %v1084
          %v1086 = vsub.f32 %v1070, %v1085
          %v1087 = vmul.f32 %v1086, %v1086
          %v1088 = vrot.slane %v1087, 4
          %v1089 = vadd.f32 %v1087, %v1088
          %v1090 = vrot.slane %v1089, 2
          %v1091 = vadd.f32 %v1089, %v1090
          %v1092 = vrot.slane %v1091, 1
          %v1093 = vadd.f32 %v1091, %v1092
          %v1094 = vmul.f32 %v1093, %v1084
          %v1095 = vld [vmem:[%s5] sm:$0x1]
          %v1097 = vperm.slane %v1095, 0
          %v1099 = vmul.f32 %v1097, %v1086
          %v1100 = vadd.f32 %v1094, 1e-05
          %v1101 = vrsqrt.pop %v1100
          %v1102 = vmul.f32 %v1101, %v1100
          %v1103 = vmul.f32 %v1102, %v1101
          %v1104 = vmul.f32 0.5, %v1103
          %v1105 = vsub.f32 1.5, %v1104
          %v1106 = vmul.f32 %v1101, %v1105
          %vm1107 = vweird.f32 %v1100
          %vm1108 = vweird.f32 %v1101
          %vm1109 = vmor %vm1107, %vm1108
          %v1110 = vsel %vm1109, %v1101, %v1106
          %v1111 = vmul.f32 %v1099, %v1110
          %v1112 = vld [vmem:[%s6] sm:$0x1]
          %v1114 = vperm.slane %v1112, 0
          %v1116 = vadd.f32 %v1111, %v1114
          %1117 = vst [vmem:[#allocation3] sm:$0xff] %v1116
        $region56: #{tpu_custom_call.1} parent=47 // pred_fallthru
          _
        // Predicated region
        $region57: #{tpu_custom_call.1} parent=47 // pred_check
          %p1118 = pneg %p198
        $region58: #{tpu_custom_call.1} parent=47 // pred_check_branch
          %1120 = sbr.rel (%p1118) target = $region60
        $region59: #{tpu_custom_call.1} parent=47 // pred_region
          %1122 = vsyncadd [#allocation4], 0
          %s1124 = sshll.u32 [#allocation3], 4
          %s1125 = int_to_ptr.vmem [resolvable:$true] %s1124
          %s1126 = sshll.u32 %s7, 4
          %s1127 = int_to_ptr.hbm [resolvable:$true] %s1126
          %1129 = dma.vmem_to_hbm [thread:$0]  %s1125, 128, %s1127, [#allocation4]
        $region60: #{tpu_custom_call.1} parent=47 // pred_fallthru
          _
        // Predicated region
        $region61: #{tpu_custom_call.1} parent=47 // pred_check
          %p1130 = pneg %p198
        $region62: #{tpu_custom_call.1} parent=47 // pred_check_branch
          %1132 = sbr.rel (%p1130) target = $region64
        $region63: #{tpu_custom_call.1} parent=47 // pred_region
          %1134 = dma.done [#allocation4], 128
        $region64: #{tpu_custom_call.1} parent=47 // pred_fallthru
          _
      $region48: #{tpu_custom_call.1} parent=5 // pred_fallthru
        _
      %p1135 = scmp.le.s32.totalorder 2, %s14
      // Predicated region
      $region65: #{tpu_custom_call.1} parent=5 // pred_check
        %p1136 = pneg %p1135
      $region66: #{tpu_custom_call.1} parent=5 // pred_check_branch
        %1138 = sbr.rel (%p1136) target = $region68
      $region67: #{tpu_custom_call.1} parent=5 // pred_region
        %s1139 = ssub.s32 %s14, 2
      $region68: #{tpu_custom_call.1} parent=5 // pred_fallthru
        _
    $region6: #{tpu_custom_call.1} parent=1 // loop_footer
      %s18 = sadd.s32 1, %s14
    $region7: #{tpu_custom_call.1} parent=1 // loop_footer_branch
      %13 = sbr.rel target = $region3
    $region8: #{tpu_custom_call.1} parent=1 // loop_exit
      _
    %1140 = vsyncpa [#allocation4], 1
    %s1141 = scalar_lea.sflag [#allocation4], 1
    %1142 = vsyncpa %s1141, 1

</llo_original>
